<compile_context>
chip_gen: v7x
topology: tpu7x:2x2x1
jax: 0.10.0
libtpu: 0.0.40
codegen_flags: <defaults>
</compile_context>

<pallas_src>
import functools

import jax
import jax.numpy as jnp
from jax import lax
from jax.experimental import pallas as pl
from jax.experimental.pallas import tpu as pltpu

EPS = 1e-8


def _vmem_capacity_bytes():
    try:
        return int(pltpu.get_tpu_info().vmem_capacity_bytes)
    except Exception:
        return 128 * 1024 * 1024


def _sum_all(x):
    # Staged (lane then sublane) full reduction of a (1, N, T) value -> (1,1,1).
    return jnp.sum(jnp.sum(x, axis=2, keepdims=True), axis=1, keepdims=True)


def _fused_kernel(y_ref, gamma_ref, beta_ref, o_ref, *, inv_count):
    """Single-pass gLN over one resident (1, N, K) row."""
    y = y_ref[...].astype(jnp.float32)                        # (1, N, K)
    mean = _sum_all(y) * inv_count                            # (1, 1, 1)
    centered = y - mean
    var = _sum_all(centered * centered) * inv_count           # (1, 1, 1)
    inv_std = lax.rsqrt(var + EPS)                            # EUP
    scale = gamma_ref[...].astype(jnp.float32) * inv_std      # (1, N, 1)
    out = centered * scale + beta_ref[...].astype(jnp.float32)
    o_ref[...] = out.astype(o_ref.dtype)


def _stats_kernel(y_ref, mean_ref, m2_ref, *, n_chan, length, tile_k):
    """Fallback pass 1: per-tile mean and centered sum-of-squares."""
    y = y_ref[...].astype(jnp.float32)                        # (1, N, TK)
    kt = -(-length // tile_k)
    rem = length - (kt - 1) * tile_k
    ragged = rem != tile_k

    def emit(yv, valid, inv_cnt):
        tmean = _sum_all(yv) * inv_cnt                        # (1, 1, 1)
        diff = yv - tmean
        if valid is not None:
            diff = jnp.where(valid, diff, 0.0)
        tm2 = _sum_all(diff * diff)                           # (1, 1, 1)
        mean_ref[...] = tmean.reshape(1, 1, 1, 1)
        m2_ref[...] = tm2.reshape(1, 1, 1, 1)

    if not ragged:
        emit(y, None, 1.0 / float(n_chan * tile_k))
    else:
        # Only the final tile pays the iota + compare + select.
        is_last = pl.program_id(1) == (kt - 1)

        @pl.when(jnp.logical_not(is_last))
        def _full_tile():
            emit(y, None, 1.0 / float(n_chan * tile_k))

        @pl.when(is_last)
        def _ragged_tile():
            lane = lax.broadcasted_iota(jnp.int32, y.shape, 2)
            valid = lane < rem
            emit(jnp.where(valid, y, 0.0), valid, 1.0 / float(n_chan * rem))


def _norm_kernel(y_ref, scale_ref, shift_ref, o_ref):
    """Fallback pass 2: per-channel affine, 2 VALU ops per element."""
    y = y_ref[...].astype(jnp.float32)                        # (1, N, TK)
    o_ref[...] = (y * scale_ref[...] + shift_ref[...]).astype(o_ref.dtype)


def _choose_tile_k(n_chan, length, itemsize, vmem_cap):
    """Pick a lane-dense K tile sized from the chip's VMEM capacity."""
    # ~8 MiB blocks on 128-MiB-VMEM parts (v5e/v6e), ~4 MiB on v7x (64 MiB).
    block_budget = max(2 << 20, min(8 << 20, vmem_cap // 16))
    tk_budget = max(128, block_budget // (max(n_chan, 1) * itemsize))
    if length <= tk_budget:
        return length                                         # full dim: always legal
    lane_cap = 8192 if vmem_cap >= (96 << 20) else 4096
    return max(128, (min(tk_budget, lane_cap) // 128) * 128)


def global_layer_norm(y, gamma, beta, *, tile_k=None, two_pass=None):
    """y: [M, N, K]; gamma, beta: [1, N, 1]. Returns gLN(y), same shape/dtype."""
    M, N, K = y.shape
    itemsize = jnp.dtype(y.dtype).itemsize
    cap = _vmem_capacity_bytes()

    if two_pass is None:
        # Fused-path VMEM need: double-buffered in + out blocks plus the f32
        # working copy of the centered row; keep ~40% headroom.
        row_bytes = N * K * (4 * itemsize + 2 * 4)
        two_pass = row_bytes > (cap * 3) // 5

    if not two_pass:
        vmem_limit = min(cap - (8 << 20), int(cap * 0.9))
        kernel = functools.partial(_fused_kernel, inv_count=1.0 / float(N * K))
        cost = pl.CostEstimate(
            flops=7 * M * N * K,
            transcendentals=M,
            bytes_accessed=2 * M * N * K * itemsize + 2 * N * 4,
        )
        return pl.pallas_call(
            kernel,
            out_shape=jax.ShapeDtypeStruct((M, N, K), y.dtype),
            grid_spec=pltpu.PrefetchScalarGridSpec(
                num_scalar_prefetch=0,
                grid=(M,),
                in_specs=[
                    pl.BlockSpec((1, N, K), lambda m: (m, 0, 0)),
                    pl.BlockSpec((1, N, 1), lambda m: (0, 0, 0)),   # resident
                    pl.BlockSpec((1, N, 1), lambda m: (0, 0, 0)),   # resident
                ],
                out_specs=pl.BlockSpec((1, N, K), lambda m: (m, 0, 0)),
            ),
            compiler_params=pltpu.CompilerParams(
                dimension_semantics=("parallel",),
                vmem_limit_bytes=vmem_limit,
            ),
            cost_estimate=cost,
        )(y, gamma, beta)

    # ---------- Two-pass fallback (row does not fit in VMEM) ----------
    tk = int(tile_k) if tile_k is not None else _choose_tile_k(N, K, itemsize, cap)
    tk = min(tk, K)
    kt = pl.cdiv(K, tk)
    needs_mask = (K % tk) != 0
    vmem_limit = min(cap * 3 // 4, 96 << 20)

    stats_kernel = functools.partial(_stats_kernel, n_chan=N, length=K, tile_k=tk)
    stats_cost = pl.CostEstimate(
        flops=5 * M * N * K,
        transcendentals=0,
        bytes_accessed=M * N * K * itemsize + 2 * M * kt * 4,
    )
    # Pass 1: fully parallel grid (megacore even at M=1); per-tile partials out.
    mean_parts, m2_parts = pl.pallas_call(
        stats_kernel,
        out_shape=(jax.ShapeDtypeStruct((M, kt, 1, 1), jnp.float32),
                   jax.ShapeDtypeStruct((M, kt, 1, 1), jnp.float32)),
        grid_spec=pltpu.PrefetchScalarGridSpec(
            num_scalar_prefetch=0,
            grid=(M, kt),
            in_specs=[pl.BlockSpec((1, N, tk), lambda m, k: (m, 0, k))],
            out_specs=[pl.BlockSpec((1, 1, 1, 1), lambda m, k: (m, k, 0, 0)),
                       pl.BlockSpec((1, 1, 1, 1), lambda m, k: (m, k, 0, 0))],
        ),
        compiler_params=pltpu.CompilerParams(
            dimension_semantics=("parallel", "parallel"),
            vmem_limit_bytes=vmem_limit,
        ),
        cost_estimate=stats_cost,
    )(y)

    # O(M * kt) group-wise combine in plain JAX (no E[y^2]-mean^2 cancellation).
    tile_mean = mean_parts.reshape(M, kt)
    tile_m2 = m2_parts.reshape(M, kt)
    counts = jnp.full((kt,), float(N * tk), jnp.float32)
    if needs_mask:
        counts = counts.at[kt - 1].set(float(N * (K - (kt - 1) * tk)))
    total = float(N * K)
    mean = jnp.sum(tile_mean * counts, axis=1, keepdims=True) / total      # (M, 1)
    m2 = jnp.sum(tile_m2 + counts * (tile_mean - mean) ** 2,
                 axis=1, keepdims=True)
    var = m2 / total
    inv_std = lax.rsqrt(var + EPS)
    scale = gamma.astype(jnp.float32) * inv_std.reshape(M, 1, 1)           # (M, N, 1)
    shift = beta.astype(jnp.float32) - scale * mean.reshape(M, 1, 1)       # (M, N, 1)

    norm_cost = pl.CostEstimate(
        flops=2 * M * N * K,
        transcendentals=0,
        bytes_accessed=2 * M * N * K * itemsize + 2 * M * N * 4,
    )
    out = pl.pallas_call(
        _norm_kernel,
        out_shape=jax.ShapeDtypeStruct((M, N, K), y.dtype),
        grid_spec=pltpu.PrefetchScalarGridSpec(
            num_scalar_prefetch=0,
            grid=(M, kt),
            in_specs=[
                pl.BlockSpec((1, N, tk), lambda m, k: (m, 0, k)),
                pl.BlockSpec((1, N, 1), lambda m, k: (m, 0, 0)),   # resident
                pl.BlockSpec((1, N, 1), lambda m, k: (m, 0, 0)),   # resident
            ],
            out_specs=pl.BlockSpec((1, N, tk), lambda m, k: (m, 0, k)),
        ),
        compiler_params=pltpu.CompilerParams(
            dimension_semantics=("parallel", "parallel"),
            vmem_limit_bytes=vmem_limit,
        ),
        cost_estimate=norm_cost,
    )(y, scale, shift)
    return out


def _reference_gln(y, gamma, beta):
    # Pure-JAX reference matching the PyTorch forward exactly.
    mean = jnp.mean(jnp.mean(y, axis=1, keepdims=True), axis=2, keepdims=True)
    var = jnp.mean(
        jnp.mean((y - mean) ** 2, axis=1, keepdims=True), axis=2, keepdims=True)
    return gamma * (y - mean) / jnp.power(var + EPS, 0.5) + beta


if __name__ == "__main__":
    key = jax.random.PRNGKey(0)
    k1, k2 = jax.random.split(key)

    # Small shapes consistent with the module: [M, N, K] = [batch, chan, len].
    # Auto-selects the fused single-pass path (row easily fits VMEM).
    M, N, K = 2, 4, 16
    y = jax.random.normal(k1, (M, N, K), dtype=jnp.float32)
    # Deterministic init matching reset_parameters(): gamma = 1, beta = 0.
    gamma = jnp.ones((1, N, 1), dtype=jnp.float32)
    beta = jnp.zeros((1, N, 1), dtype=jnp.float32)

    out = jax.block_until_ready(global_layer_norm(y, gamma, beta))
    ref = _reference_gln(y, gamma, beta)
    assert out.shape == (M, N, K)
    assert jnp.allclose(out, ref, atol=3e-5, rtol=3e-5), "mismatch (fused path)"

    # Exercise the two-pass fallback with a ragged (masked) tail tile.
    M2, N2, K2 = 2, 8, 320
    y2 = jax.random.normal(k2, (M2, N2, K2), dtype=jnp.float32)
    g2 = jax.random.normal(jax.random.PRNGKey(1), (1, N2, 1), dtype=jnp.float32)
    b2 = jax.random.normal(jax.random.PRNGKey(2), (1, N2, 1), dtype=jnp.float32)
    out2 = jax.block_until_ready(
        global_layer_norm(y2, g2, b2, tile_k=128, two_pass=True))
    ref2 = _reference_gln(y2, g2, b2)
    assert out2.shape == (M2, N2, K2)
    assert jnp.allclose(out2, ref2, atol=3e-5, rtol=3e-5), "mismatch (tiled path)"

    # Non-zero-mean input through the fallback (checks the centered variance
    # formulation; the old E[y^2]-mean^2 form degrades badly here).
    y3 = y2 + 100.0
    out3 = jax.block_until_ready(
        global_layer_norm(y3, g2, b2, tile_k=128, two_pass=True))
    ref3 = _reference_gln(y3, g2, b2)
    assert jnp.allclose(out3, ref3, atol=5e-3, rtol=5e-3), "mismatch (shifted)"

    print("KERNEL_OK")
</pallas_src>

<mosaic_0001>
module attributes {stable_mosaic.version = 11 : i64} {
  func.func @_fused_kernel(%arg0: i32, %arg1: memref<1x4x16xf32, #tpu.memory_space<vmem>>, %arg2: memref<1x4x1xf32, #tpu.memory_space<vmem>>, %arg3: memref<1x4x1xf32, #tpu.memory_space<vmem>>, %arg4: memref<1x4x16xf32, #tpu.memory_space<vmem>>) attributes {dimension_semantics = [#tpu.dimension_semantics<parallel>], iteration_bounds = array<i64: 2>, scalar_prefetch = 0 : i64, scratch_operands = 0 : i64, tpu.core_type = #tpu.core_type<tc>, window_params = [{transform_indices = @transform_0, window_bounds = array<i64: 1, 4, 16>}, {pipeline_mode = #tpu.pipeline_mode<synchronous>, transform_indices = @transform_1, window_bounds = array<i64: 1, 4, 1>}, {pipeline_mode = #tpu.pipeline_mode<synchronous>, transform_indices = @transform_2, window_bounds = array<i64: 1, 4, 1>}, {transform_indices = @transform_3, window_bounds = array<i64: 1, 4, 16>}]} {
    %c0 = arith.constant 0 : index
    %c0_0 = arith.constant 0 : index
    %c0_1 = arith.constant 0 : index
    %0 = vector.load %arg1[%c0, %c0_0, %c0_1] : memref<1x4x16xf32, #tpu.memory_space<vmem>>, vector<1x4x16xf32>
    %cst = arith.constant dense<0.000000e+00> : vector<1x4xf32>
    %1 = vector.multi_reduction <add>, %0, %cst [2] : vector<1x4x16xf32> to vector<1x4xf32>
    %2 = vector.shape_cast %1 : vector<1x4xf32> to vector<1x4x1xf32>
    %cst_2 = arith.constant dense<0.000000e+00> : vector<1x1xf32>
    %3 = vector.multi_reduction <add>, %2, %cst_2 [1] : vector<1x4x1xf32> to vector<1x1xf32>
    %4 = vector.shape_cast %3 : vector<1x1xf32> to vector<1x1x1xf32>
    %cst_3 = arith.constant 1.562500e-02 : f32
    %5 = vector.broadcast %cst_3 : f32 to vector<1x1x1xf32>
    %6 = arith.mulf %4, %5 : vector<1x1x1xf32>
    %7 = vector.broadcast %6 : vector<1x1x1xf32> to vector<1x4x16xf32>
    %8 = arith.subf %0, %7 : vector<1x4x16xf32>
    %9 = arith.mulf %8, %8 : vector<1x4x16xf32>
    %cst_4 = arith.constant dense<0.000000e+00> : vector<1x4xf32>
    %10 = vector.multi_reduction <add>, %9, %cst_4 [2] : vector<1x4x16xf32> to vector<1x4xf32>
    %11 = vector.shape_cast %10 : vector<1x4xf32> to vector<1x4x1xf32>
    %cst_5 = arith.constant dense<0.000000e+00> : vector<1x1xf32>
    %12 = vector.multi_reduction <add>, %11, %cst_5 [1] : vector<1x4x1xf32> to vector<1x1xf32>
    %13 = vector.shape_cast %12 : vector<1x1xf32> to vector<1x1x1xf32>
    %cst_6 = arith.constant 1.562500e-02 : f32
    %14 = vector.broadcast %cst_6 : f32 to vector<1x1x1xf32>
    %15 = arith.mulf %13, %14 : vector<1x1x1xf32>
    %cst_7 = arith.constant 9.99999993E-9 : f32
    %16 = vector.broadcast %cst_7 : f32 to vector<1x1x1xf32>
    %17 = arith.addf %15, %16 : vector<1x1x1xf32>
    %18 = math.rsqrt %17 : vector<1x1x1xf32>
    %c0_8 = arith.constant 0 : index
    %c0_9 = arith.constant 0 : index
    %c0_10 = arith.constant 0 : index
    %19 = vector.load %arg2[%c0_8, %c0_9, %c0_10] : memref<1x4x1xf32, #tpu.memory_space<vmem>>, vector<1x4x1xf32>
    %20 = vector.broadcast %18 : vector<1x1x1xf32> to vector<1x4x1xf32>
    %21 = arith.mulf %19, %20 : vector<1x4x1xf32>
    %22 = vector.broadcast %21 : vector<1x4x1xf32> to vector<1x4x16xf32>
    %23 = arith.mulf %8, %22 : vector<1x4x16xf32>
    %c0_11 = arith.constant 0 : index
    %c0_12 = arith.constant 0 : index
    %c0_13 = arith.constant 0 : index
    %24 = vector.load %arg3[%c0_11, %c0_12, %c0_13] : memref<1x4x1xf32, #tpu.memory_space<vmem>>, vector<1x4x1xf32>
    %25 = vector.broadcast %24 : vector<1x4x1xf32> to vector<1x4x16xf32>
    %26 = arith.addf %23, %25 : vector<1x4x16xf32>
    %c0_14 = arith.constant 0 : index
    %c0_15 = arith.constant 0 : index
    %c0_16 = arith.constant 0 : index
    %27 = vector.load %arg4[%c0_14, %c0_15, %c0_16] : memref<1x4x16xf32, #tpu.memory_space<vmem>>, vector<1x4x16xf32>
    tpu.vector_store %arg4[%c0_14, %c0_15, %c0_16], %26 {strides = array<i32>} : memref<1x4x16xf32, #tpu.memory_space<vmem>>, vector<1x4x16xf32>,
    return
  }
  func.func @transform_0(%arg0: i32) -> (i32, i32, i32) {
    %c0_i32 = arith.constant 0 : i32
    %c0_i32_0 = arith.constant 0 : i32
    %c0_i32_1 = arith.constant 0 : i32
    return %arg0, %c0_i32, %c0_i32_0 : i32, i32, i32
  }
  func.func @transform_1(%arg0: i32) -> (i32, i32, i32) {
    %c0_i32 = arith.constant 0 : i32
    %c0_i32_0 = arith.constant 0 : i32
    %c0_i32_1 = arith.constant 0 : i32
    %c0_i32_2 = arith.constant 0 : i32
    return %c0_i32, %c0_i32_0, %c0_i32_1 : i32, i32, i32
  }
  func.func @transform_2(%arg0: i32) -> (i32, i32, i32) {
    %c0_i32 = arith.constant 0 : i32
    %c0_i32_0 = arith.constant 0 : i32
    %c0_i32_1 = arith.constant 0 : i32
    %c0_i32_2 = arith.constant 0 : i32
    return %c0_i32, %c0_i32_0, %c0_i32_1 : i32, i32, i32
  }
  func.func @transform_3(%arg0: i32) -> (i32, i32, i32) {
    %c0_i32 = arith.constant 0 : i32
    %c0_i32_0 = arith.constant 0 : i32
    %c0_i32_1 = arith.constant 0 : i32
    return %arg0, %c0_i32, %c0_i32_0 : i32, i32, i32
  }
}

</mosaic_0001>

<llo_original>
// kernel: tpu_custom_call.1
$region0: #{tpu_custom_call.1}
  #allocation0 [shape = 'u32[]', space=smem, size = 0x4, offset = 0x4, fixed_abs, tag = 'smem constant byte address 0x4 - core index']
  #allocation1 [shape = 'u32[144,128]{1,0:T(1,128)}', space=vmem, size = 0x12000, scoped, tag = 'internal scratch']
  %s0 = inlined_call_operand.hbm [shape: f32[2,4,16], index: 0, kind: input, shape index: {}]
  %s1 = inlined_call_operand.hbm [shape: f32[1,4,1], index: 1, kind: input, shape index: {}]
  %s2 = inlined_call_operand.hbm [shape: f32[1,4,1], index: 2, kind: input, shape index: {}]
  %s3 = inlined_call_operand.hbm [shape: f32[2,4,16], index: 3, kind: output, shape index: {}]
  %s4 = sld [smem:[#allocation0]]
  $region57: #{tpu_custom_call.1} parent=0
    _
  %s6 = ssub.s32 1, %s4
  %s7 = scalar_select 0, %s6, %s4
  $region1: #{tpu_custom_call.1} parent=0
    #allocation2 [shape = 'u8[4096]{0}', space=vmem, size = 0x1000, scoped, tag = 'input window, operand 0']
    #allocation3 [shape = 's32[2]{0}', space=sflag, size = 0x8, scoped, tag = 'scoped memory for tpu_custom_call.1']
    #allocation4 [shape = 's32[2]{0}', space=sflag, size = 0x8, scoped, tag = 'scoped memory for tpu_custom_call.1']
    #allocation5 [shape = 'u8[2048]{0}', space=vmem, size = 0x800, scoped, tag = 'input window, operand 1, single buffered']
    #allocation6 [shape = 's32[1]{0}', space=sflag, size = 0x4, scoped, tag = 'scoped memory for tpu_custom_call.1']
    #allocation7 [shape = 'u8[2048]{0}', space=vmem, size = 0x800, scoped, tag = 'input window, operand 2, single buffered']
    #allocation8 [shape = 'u8[4096]{0}', space=vmem, size = 0x1000, scoped, tag = 'output window, operand 0']
    %8 = vsyncpa [#allocation3], 0
    %s9 = scalar_lea.sflag [#allocation3], 1
    %10 = vsyncpa %s9, 0
    %11 = vsyncpa [#allocation6], 0
    %12 = vsyncpa [#allocation4], 0
    %s13 = scalar_lea.sflag [#allocation4], 1
    %14 = vsyncpa %s13, 0
    loop: start=0, step=1, limit=4
    $region2: #{tpu_custom_call.1} parent=1 // loop_pre_header
      _
    $region3: #{tpu_custom_call.1} parent=1 // loop_header
      %s16 = sphi 0, %s20
      %p17 = scmp.ge.s32.totalorder %s16, 4
      %s26 = sphi 0, %s28
      %s29 = sphi 0, %s26
      %s30 = sphi 0, %s29
      %s46 = sphi 0, %s30
      %s50 = sphi 0, %s50
      %s52 = sphi 0, %s50
      %s53 = sphi 0, %s52
      %s67 = sphi 0, %s53
      %s71 = sphi 0, %s71
      %s73 = sphi 0, %s71
      %s74 = sphi 0, %s73
      %s88 = sphi 0, %s74
      %s94 = sphi 0, %s96
      %s97 = sphi 0, %s94
      %s98 = sphi 0, %s97
      %s114 = sphi 0, %s98
    $region4: #{tpu_custom_call.1} parent=1 // loop_header_branch
      %19 = sbr.rel (%p17) target = $region8
    $region5: #{tpu_custom_call.1} parent=1 // loop_body
      %s21 = ssub.s32 %s16, 1
      %s22 = ssub.s32 %s16, 2
      %s23 = sadd.s32 %s16, 1
      %s24 = ssub.s32 %s16, %s23
      %p25 = scmp.eq.s32.totalorder %s24, 0
      %s27 = sadd.s32 %s26, 1
      %s28 = scalar_select %p25, %s26, %s27
      %p31 = pneg %p25
      %p32 = scmp.eq.s32.totalorder %s16, 1
      %p33 = por %p31, %p32
      %p34 = scmp.ne.s32.totalorder %s26, %s29
      %p35 = scmp.eq.s32.totalorder %s16, 0
      %p36 = por %p34, %p35
      %p37 = scmp.ne.s32.totalorder %s26, %s29
      %p38 = scmp.eq.s32.totalorder %s21, 1
      %p39 = por %p37, %p38
      %p40 = scmp.ne.s32.totalorder %s29, %s30
      %p41 = scmp.eq.s32.totalorder %s21, 0
      %p42 = por %p40, %p41
      %p43 = scmp.ne.s32.totalorder %s29, %s30
      %p44 = scmp.eq.s32.totalorder %s22, 1
      %p45 = por %p43, %p44
      %p47 = scmp.ne.s32.totalorder %s30, %s46
      %p48 = scmp.eq.s32.totalorder %s22, 0
      %p49 = por %p47, %p48
      %s51 = sadd.s32 %s50, 1
      %p54 = scmp.eq.s32.totalorder %s16, 1
      %p55 = scmp.ne.s32.totalorder %s50, %s52
      %p56 = scmp.eq.s32.totalorder %s16, 0
      %p57 = por %p55, %p56
      %p58 = scmp.ne.s32.totalorder %s50, %s52
      %p59 = scmp.eq.s32.totalorder %s21, 1
      %p60 = por %p58, %p59
      %p61 = scmp.ne.s32.totalorder %s52, %s53
      %p62 = scmp.eq.s32.totalorder %s21, 0
      %p63 = por %p61, %p62
      %p64 = scmp.ne.s32.totalorder %s52, %s53
      %p65 = scmp.eq.s32.totalorder %s22, 1
      %p66 = por %p64, %p65
      %p68 = scmp.ne.s32.totalorder %s53, %s67
      %p69 = scmp.eq.s32.totalorder %s22, 0
      %p70 = por %p68, %p69
      %s72 = sadd.s32 %s71, 1
      %p75 = scmp.eq.s32.totalorder %s16, 1
      %p76 = scmp.ne.s32.totalorder %s71, %s73
      %p77 = scmp.eq.s32.totalorder %s16, 0
      %p78 = por %p76, %p77
      %p79 = scmp.ne.s32.totalorder %s71, %s73
      %p80 = scmp.eq.s32.totalorder %s21, 1
      %p81 = por %p79, %p80
      %p82 = scmp.ne.s32.totalorder %s73, %s74
      %p83 = scmp.eq.s32.totalorder %s21, 0
      %p84 = por %p82, %p83
      %p85 = scmp.ne.s32.totalorder %s73, %s74
      %p86 = scmp.eq.s32.totalorder %s22, 1
      %p87 = por %p85, %p86
      %p89 = scmp.ne.s32.totalorder %s74, %s88
      %p90 = scmp.eq.s32.totalorder %s22, 0
      %p91 = por %p89, %p90
      %s92 = ssub.s32 %s16, %s23
      %p93 = scmp.eq.s32.totalorder %s92, 0
      %s95 = sadd.s32 %s94, 1
      %s96 = scalar_select %p93, %s94, %s95
      %p99 = pneg %p93
      %p100 = scmp.eq.s32.totalorder %s16, 1
      %p101 = por %p99, %p100
      %p102 = scmp.ne.s32.totalorder %s94, %s97
      %p103 = scmp.eq.s32.totalorder %s16, 0
      %p104 = por %p102, %p103
      %p105 = scmp.ne.s32.totalorder %s94, %s97
      %p106 = scmp.eq.s32.totalorder %s21, 1
      %p107 = por %p105, %p106
      %p108 = scmp.ne.s32.totalorder %s97, %s98
      %p109 = scmp.eq.s32.totalorder %s21, 0
      %p110 = por %p108, %p109
      %p111 = scmp.ne.s32.totalorder %s97, %s98
      %p112 = scmp.eq.s32.totalorder %s22, 1
      %p113 = por %p111, %p112
      %p115 = scmp.ne.s32.totalorder %s98, %s114
      %p116 = scmp.eq.s32.totalorder %s22, 0
      %p117 = por %p115, %p116
      %p118 = scmp.le.s32.totalorder 1, %s16
      %p119 = scmp.lt.s32.totalorder %s16, 3
      %p120 = pnand %p118, %p119
      %p121 = pneg %p120
      // Predicated region
      $region9: #{tpu_custom_call.1} parent=5 // pred_check
        _
      $region10: #{tpu_custom_call.1} parent=5 // pred_check_branch
        %123 = sbr.rel (%p120) target = $region12
      $region11: #{tpu_custom_call.1} parent=5 // pred_region
        %s124 = ssub.s32 %s16, 1
        // Predicated region
        $region13: #{tpu_custom_call.1} parent=11 // pred_check
          %p125 = pneg %p63
        $region14: #{tpu_custom_call.1} parent=11 // pred_check_branch
          %127 = sbr.rel (%p125) target = $region16
        $region15: #{tpu_custom_call.1} parent=11 // pred_region
          %s129 = ssub.s32 64, 64
          %130 = vsyncadd [#allocation6], %s129
          %s132 = sshll.u32 [#allocation5], 4
          %s133 = int_to_ptr.vmem [resolvable:$true] %s132
          %135 = dma.hbm_to_vmem [thread:$0]  %s1, 64, %s133, [#allocation6]
        $region16: #{tpu_custom_call.1} parent=11 // pred_fallthru
          _
        // Predicated region
        $region17: #{tpu_custom_call.1} parent=11 // pred_check
          %p136 = pneg %p84
        $region18: #{tpu_custom_call.1} parent=11 // pred_check_branch
          %138 = sbr.rel (%p136) target = $region20
        $region19: #{tpu_custom_call.1} parent=11 // pred_region
          %s140 = ssub.s32 64, 64
          %141 = vsyncadd [#allocation6], %s140
          %s143 = sshll.u32 [#allocation7], 4
          %s144 = int_to_ptr.vmem [resolvable:$true] %s143
          %146 = dma.hbm_to_vmem [thread:$0]  %s2, 64, %s144, [#allocation6]
        $region20: #{tpu_custom_call.1} parent=11 // pred_fallthru
          _
      $region12: #{tpu_custom_call.1} parent=5 // pred_fallthru
        _
      %p147 = scmp.lt.s32.totalorder %s16, 2
      // Predicated region
      $region21: #{tpu_custom_call.1} parent=5 // pred_check
        %p148 = pneg %p147
      $region22: #{tpu_custom_call.1} parent=5 // pred_check_branch
        %150 = sbr.rel (%p148) target = $region24
      $region23: #{tpu_custom_call.1} parent=5 // pred_region
        // Predicated region
        $region25: #{tpu_custom_call.1} parent=23 // pred_check
          %p151 = pneg %p36
        $region26: #{tpu_custom_call.1} parent=23 // pred_check_branch
          %153 = sbr.rel (%p151) target = $region28
        $region27: #{tpu_custom_call.1} parent=23 // pred_region
          %s154 = sand.u32 %s26, 1
          %s155 = scalar_lea.sflag [#allocation3], %s154
          %s156 = sand.u32 %s26, 1
          %s157 = smul.addr %s156, 4
          %s158 = scalar_lea.vmem [#allocation2], %s157
          %s160 = ssub.s32 64, 64
          %161 = vsyncadd %s155, %s160
          %s162 = smul.addr %s16, 64
          %s163 = scalar_lea.hbm %s0, %s162
          %s165 = sshll.u32 %s158, 4
          %s166 = int_to_ptr.vmem [resolvable:$true] %s165
          %168 = dma.hbm_to_vmem [thread:$0]  %s163, 64, %s166, %s155
        $region28: #{tpu_custom_call.1} parent=23 // pred_fallthru
          _
      $region24: #{tpu_custom_call.1} parent=5 // pred_fallthru
        _
      %p169 = scmp.le.s32.totalorder 1, %s16
      %p170 = scmp.lt.s32.totalorder %s16, 3
      %p171 = pnand %p169, %p170
      %p172 = pneg %p171
      // Predicated region
      $region29: #{tpu_custom_call.1} parent=5 // pred_check
        _
      $region30: #{tpu_custom_call.1} parent=5 // pred_check_branch
        %174 = sbr.rel (%p171) target = $region32
      $region31: #{tpu_custom_call.1} parent=5 // pred_region
        %s175 = ssub.s32 %s16, 1
        %s176 = sand.u32 %s29, 1
        %s177 = scalar_lea.sflag [#allocation3], %s176
        %s178 = sand.u32 %s29, 1
        %s179 = smul.addr %s178, 4
        %s180 = scalar_lea.vmem [#allocation2], %s179
        // Predicated region
        $region33: #{tpu_custom_call.1} parent=31 // pred_check
          %p181 = pneg %p42
        $region34: #{tpu_custom_call.1} parent=31 // pred_check_branch
          %183 = sbr.rel (%p181) target = $region36
        $region35: #{tpu_custom_call.1} parent=31 // pred_region
          %184 = dma.done %s177, 64
        $region36: #{tpu_custom_call.1} parent=31 // pred_fallthru
          _
        // Predicated region
        $region37: #{tpu_custom_call.1} parent=31 // pred_check
          %p185 = pneg %p63
        $region38: #{tpu_custom_call.1} parent=31 // pred_check_branch
          %187 = sbr.rel (%p185) target = $region40
        $region39: #{tpu_custom_call.1} parent=31 // pred_region
          %188 = dma.done [#allocation6], 64
        $region40: #{tpu_custom_call.1} parent=31 // pred_fallthru
          _
        // Predicated region
        $region41: #{tpu_custom_call.1} parent=31 // pred_check
          %p189 = pneg %p84
        $region42: #{tpu_custom_call.1} parent=31 // pred_check_branch
          %191 = sbr.rel (%p189) target = $region44
        $region43: #{tpu_custom_call.1} parent=31 // pred_region
          %192 = dma.done [#allocation6], 64
        $region44: #{tpu_custom_call.1} parent=31 // pred_fallthru
          _
        %s193 = sand.u32 %s29, 1
        %s194 = scalar_lea.sflag [#allocation3], %s193
        %s195 = sand.u32 %s29, 1
        %s196 = smul.addr %s195, 4
        %s197 = scalar_lea.vmem [#allocation2], %s196
        %p198 = pneg %p42
        %p199 = pneg %p39
        %p200 = pneg %p63
        %p201 = pneg %p60
        %p202 = pneg %p84
        %p203 = pneg %p81
        %p204 = pneg %p110
        %p205 = pneg %p107
        %s206 = sand.u32 %s97, 1
        %s207 = scalar_lea.sflag [#allocation4], %s206
        %s208 = sand.u32 %s97, 1
        %s209 = smul.addr %s208, 4
        %s210 = scalar_lea.vmem [#allocation8], %s209
        %v211 = vld [vmem:[%s180] sm:$0xf]
        %vm212 = vcmask 125952
        %v213 = vsel %vm212, %v211, 0.0
        %214 = vadd.xlane.f32.xlu0 %v213
        %v215 = vpop.xlane.xlu0 %214
        %vm216 = vcmask 1043456
        %v217 = vsel %vm216, %v215, 0.0
        %v218 = vrot.slane %v217, 4
        %v219 = vadd.f32 %v217, %v218
        %v220 = vrot.slane %v219, 2
        %v221 = vadd.f32 %v219, %v220
        %v222 = vrot.slane %v221, 1
        %v223 = vadd.f32 %v221, %v222
        %v224 = vmul.f32 %v223, 0.015625
        %v225 = vsub.f32 %v211, %v224
        %v226 = vmul.f32 %v225, %v225
        %v227 = vsel %vm212, %v226, 0.0
        %228 = vadd.xlane.f32.xlu0 %v227
        %v229 = vpop.xlane.xlu0 %228
        %v230 = vsel %vm216, %v229, 0.0
        %v231 = vrot.slane %v230, 4
        %v232 = vadd.f32 %v230, %v231
        %v233 = vrot.slane %v232, 2
        %v234 = vadd.f32 %v232, %v233
        %v235 = vrot.slane %v234, 1
        %v236 = vadd.f32 %v234, %v235
        %v237 = vmul.f32 %v236, 0.015625
        %v238 = vadd.f32 %v237, 1e-08
        %v239 = vrsqrt.pop %v238
        %v240 = vld [vmem:[#allocation5] sm:$0xf]
        %v241 = vmul.f32 %v240, %v239
        %243 = vset.pattern.permute.xlu0 0
        %244 = vperm.xlu0 %243, %v241
        %v245 = vpop.permute.xlu0 %244
        %v247 = vmul.f32 %v225, %v245
        %v248 = vld [vmem:[#allocation7] sm:$0xf]
        %250 = vset.pattern.permute.xlu0 0
        %251 = vperm.xlu0 %250, %v248
        %v252 = vpop.permute.xlu0 %251
        %v254 = vadd.f32 %v247, %v252
        %255 = vst.msk [vmem:[%s210] sm:$0xf] %vm212, %v254
        %s256 = sand.u32 %s97, 1
        %s257 = scalar_lea.sflag [#allocation4], %s256
        %s258 = sand.u32 %s97, 1
        %s259 = smul.addr %s258, 4
        %s260 = scalar_lea.vmem [#allocation8], %s259
        // Predicated region
        $region45: #{tpu_custom_call.1} parent=31 // pred_check
          %p261 = pneg %p107
        $region46: #{tpu_custom_call.1} parent=31 // pred_check_branch
          %263 = sbr.rel (%p261) target = $region48
        $region47: #{tpu_custom_call.1} parent=31 // pred_region
          %s265 = ssub.s32 64, 64
          %266 = vsyncadd %s257, %s265
          %s267 = smul.addr %s21, 64
          %s268 = scalar_lea.hbm %s3, %s267
          %s270 = sshll.u32 %s260, 4
          %s271 = int_to_ptr.vmem [resolvable:$true] %s270
          %273 = dma.vmem_to_hbm [thread:$0]  %s271, 64, %s268, %s257
        $region48: #{tpu_custom_call.1} parent=31 // pred_fallthru
          _
      $region32: #{tpu_custom_call.1} parent=5 // pred_fallthru
        _
      %p274 = scmp.le.s32.totalorder 2, %s16
      // Predicated region
      $region49: #{tpu_custom_call.1} parent=5 // pred_check
        %p275 = pneg %p274
      $region50: #{tpu_custom_call.1} parent=5 // pred_check_branch
        %277 = sbr.rel (%p275) target = $region52
      $region51: #{tpu_custom_call.1} parent=5 // pred_region
        %s278 = ssub.s32 %s16, 2
        // Predicated region
        $region53: #{tpu_custom_call.1} parent=51 // pred_check
          %p279 = pneg %p113
        $region54: #{tpu_custom_call.1} parent=51 // pred_check_branch
          %281 = sbr.rel (%p279) target = $region56
        $region55: #{tpu_custom_call.1} parent=51 // pred_region
          %s282 = sand.u32 %s98, 1
          %s283 = scalar_lea.sflag [#allocation4], %s282
          %s284 = sand.u32 %s98, 1
          %s285 = smul.addr %s284, 4
          %s286 = scalar_lea.vmem [#allocation8], %s285
          %287 = dma.done %s283, 64
        $region56: #{tpu_custom_call.1} parent=51 // pred_fallthru
          _
      $region52: #{tpu_custom_call.1} parent=5 // pred_fallthru
        _
    $region6: #{tpu_custom_call.1} parent=1 // loop_footer
      %s20 = sadd.s32 1, %s16
    $region7: #{tpu_custom_call.1} parent=1 // loop_footer_branch
      %15 = sbr.rel target = $region3
    $region8: #{tpu_custom_call.1} parent=1 // loop_exit
      _
    %288 = vsyncpa [#allocation3], 1
    %s289 = scalar_lea.sflag [#allocation3], 1
    %290 = vsyncpa %s289, 1
    %291 = vsyncpa [#allocation6], 1
    %292 = vsyncpa [#allocation4], 1
    %s293 = scalar_lea.sflag [#allocation4], 1
    %294 = vsyncpa %s293, 1

</llo_original>
